<compile_context>
chip_gen: v5e
topology: v5e:2x2
jax: 0.10.0
libtpu: 0.0.40
codegen_flags: <defaults>
</compile_context>

<pallas_src>
import jax
import jax.numpy as jnp
from jax.experimental import pallas as pl
from jax.experimental.pallas import tpu as pltpu


def _round_up(x, m):
    return ((x + m - 1) // m) * m


def _sublane_multiple(dtype):
    # 8 rows for 4-byte types, 16 for bf16/fp16, 32 for int8/fp8 (packed sublanes).
    return max(8, 32 // jnp.dtype(dtype).itemsize)


# ---------------------------------------------------------------------------
# Kernel factory. grid = (M/tm, N/tn, K/tk), K (reduction) innermost.
# ---------------------------------------------------------------------------
def _make_linear_kernel(*, compute_dtype, in_dim, tk, mask_k, use_acc_scratch):
    def kernel(x_ref, w_ref, b_ref, o_ref, *scratch):
        # f32 output: accumulate directly into the (k-invariant, VMEM-resident)
        # output block; otherwise use the dedicated f32 scratch accumulator.
        acc_ref = scratch[0] if use_acc_scratch else o_ref
        k = pl.program_id(2)

        @pl.when(k == 0)
        def _init():
            acc_ref[...] = jnp.zeros_like(acc_ref)

        x = x_ref[...]
        w = w_ref[...]
        if mask_k:
            # Only the K (contraction) tail needs masking: out-of-bounds K values are
            # garbage and would otherwise be accumulated into valid outputs.
            kcol = jax.lax.broadcasted_iota(jnp.int32, x.shape, 1) + k * tk
            x = jnp.where(kcol < in_dim, x, jnp.zeros_like(x))
            krow = jax.lax.broadcasted_iota(jnp.int32, w.shape, 0) + k * tk
            w = jnp.where(krow < in_dim, w, jnp.zeros_like(w))
        if x.dtype != compute_dtype:
            x = x.astype(compute_dtype)          # bf16 operands for the MXU

        acc_ref[...] += jnp.dot(x, w, preferred_element_type=jnp.float32)

        @pl.when(k == pl.num_programs(2) - 1)
        def _finalize():
            o_ref[...] = (acc_ref[...] + b_ref[...]).astype(o_ref.dtype)

    return kernel


# ---------------------------------------------------------------------------
# One-time parameter prep (do NOT redo per forward in a real deployment).
# ---------------------------------------------------------------------------
def svm_prepare_params(weight, bias, compute_dtype=jnp.bfloat16):
    """Cast W to the MXU compute dtype and transpose once to (input_dim, output_dim);
    bias becomes a (1, output_dim) f32 row for the epilogue."""
    w_t = jnp.asarray(weight).T.astype(compute_dtype)            # (K, N)
    b_row = jnp.asarray(bias).astype(jnp.float32).reshape(1, -1)  # (1, N)
    return w_t, b_row


# ---------------------------------------------------------------------------
# Kernel caller (operates on prepared parameters).
# ---------------------------------------------------------------------------
def svm_apply(x, w_t, bias_row, *, compute_dtype=None, tm=512, tn=512, tk=1024):
    if compute_dtype is None:
        compute_dtype = w_t.dtype
    in_dim, out_dim = w_t.shape
    assert x.shape[-1] == in_dim
    lead = x.shape[:-1]
    x2 = x.reshape(-1, in_dim)
    m = x2.shape[0]
    out_dtype = x.dtype

    # Tile selection: clamp to the (padded) problem so small dims stream only once
    # (small out_dim -> x streams once; small batch -> W streams once).
    sub = _sublane_multiple(compute_dtype)
    tm = min(tm, _round_up(m, sub))
    tn = min(tn, _round_up(out_dim, 128))
    tk = min(tk, _round_up(in_dim, 128))

    # v7x megacore: ensure at least one "parallel" axis has >= 2 blocks when possible.
    gm, gn = pl.cdiv(m, tm), pl.cdiv(out_dim, tn)
    if gm * gn == 1:
        if tn >= 256:
            tn = _round_up(tn // 2, 128)
        elif tm >= 2 * sub:
            tm = _round_up(tm // 2, sub)
        gm, gn = pl.cdiv(m, tm), pl.cdiv(out_dim, tn)
    gk = pl.cdiv(in_dim, tk)
    mask_k = (in_dim % tk) != 0

    use_acc_scratch = jnp.dtype(out_dtype) != jnp.dtype(jnp.float32)
    scratch_shapes = (pltpu.VMEM((tm, tn), jnp.float32),) if use_acc_scratch else ()

    kernel = _make_linear_kernel(
        compute_dtype=compute_dtype, in_dim=in_dim, tk=tk,
        mask_k=mask_k, use_acc_scratch=use_acc_scratch)

    # Explicit VMEM budget (double-buffered inputs/outputs + optional accumulator),
    # with headroom; capped well under v7x's 64 MiB physical per-TensorCore VMEM.
    x_sz = jnp.dtype(x2.dtype).itemsize
    w_sz = jnp.dtype(w_t.dtype).itemsize
    o_sz = jnp.dtype(out_dtype).itemsize
    vmem_est = (2 * tm * tk * x_sz + 2 * tk * tn * w_sz + 2 * tn * 4
                + 2 * tm * tn * o_sz + (tm * tn * 4 if use_acc_scratch else 0))
    vmem_limit = int(min(48 * 1024 * 1024, max(2 * vmem_est, 8 * 1024 * 1024)))

    cost = pl.CostEstimate(
        flops=2 * m * out_dim * in_dim,
        transcendentals=0,
        bytes_accessed=(m * in_dim * x_sz + in_dim * out_dim * w_sz
                        + out_dim * 4 + m * out_dim * o_sz),
    )

    y = pl.pallas_call(
        kernel,
        out_shape=jax.ShapeDtypeStruct((m, out_dim), out_dtype),
        grid_spec=pltpu.PrefetchScalarGridSpec(
            num_scalar_prefetch=0,
            grid=(gm, gn, gk),
            in_specs=[
                pl.BlockSpec((tm, tk), lambda i, j, k: (i, k)),   # x tile (M, K)
                pl.BlockSpec((tk, tn), lambda i, j, k: (k, j)),   # W^T tile (K, N)
                pl.BlockSpec((1, tn), lambda i, j, k: (0, j)),    # bias tile
            ],
            out_specs=pl.BlockSpec((tm, tn), lambda i, j, k: (i, j)),
            scratch_shapes=scratch_shapes,
        ),
        compiler_params=pltpu.CompilerParams(
            # M/N parallel -> both TensorCores on v7x; K is the serial reduction.
            dimension_semantics=("parallel", "parallel", "arbitrary"),
            vmem_limit_bytes=vmem_limit,
        ),
        cost_estimate=cost,
    )(x2, w_t, bias_row)

    return y.reshape(lead + (out_dim,))


# ---------------------------------------------------------------------------
# Public entry point (PyTorch nn.Linear / SVM.forward semantics).
# ---------------------------------------------------------------------------
def svm_forward(x, weight, bias, *, compute_dtype=jnp.bfloat16):
    """y = x @ weight.T + bias.

    weight: (output_dim, input_dim) — native PyTorch layout.
    compute_dtype: MXU operand dtype (bf16 default for performance; pass jnp.float32
                   for bit-faithful nn.Linear numerics). Accumulation and the bias
                   epilogue are always f32.
    In a real deployment call svm_prepare_params() once and reuse its outputs.
    """
    w_t, b_row = svm_prepare_params(weight, bias, compute_dtype)
    return svm_apply(x, w_t, b_row, compute_dtype=compute_dtype)


if __name__ == "__main__":
    key = jax.random.PRNGKey(0)
    kx, kw, kb, kx2, kw2, kb2 = jax.random.split(key, 6)

    # --- SVM(input_dim=32, output_dim=16), batch=8.
    batch, input_dim, output_dim = 8, 32, 16
    x = jax.random.normal(kx, (batch, input_dim), dtype=jnp.float32)
    bound = 1.0 / jnp.sqrt(jnp.float32(input_dim))
    weight = jax.random.uniform(kw, (output_dim, input_dim), jnp.float32, -bound, bound)
    bias = jax.random.uniform(kb, (output_dim,), jnp.float32, -bound, bound)
    y_ref = x @ weight.T + bias

    # Exact-numerics path (f32 MXU operands).
    y_f32 = jax.block_until_ready(svm_forward(x, weight, bias, compute_dtype=jnp.float32))
    assert y_f32.shape == (batch, output_dim)
    assert jnp.allclose(y_f32, y_ref, atol=1e-5, rtol=1e-5)

    # Performance-default path (bf16 MXU operands, f32 accumulation + epilogue).
    y_bf16 = jax.block_until_ready(svm_forward(x, weight, bias))
    assert y_bf16.shape == (batch, output_dim)
    assert jnp.allclose(y_bf16, y_ref, atol=3e-2, rtol=3e-2)

    # --- Odd, larger shapes: multi-block grid, K-tail masking, megacore split.
    b2, i2, o2 = 300, 200, 150
    x2 = jax.random.normal(kx2, (b2, i2), dtype=jnp.float32)
    bound2 = 1.0 / jnp.sqrt(jnp.float32(i2))
    weight2 = jax.random.uniform(kw2, (o2, i2), jnp.float32, -bound2, bound2)
    bias2 = jax.random.uniform(kb2, (o2,), jnp.float32, -bound2, bound2)
    y2_ref = x2 @ weight2.T + bias2

    y2_f32 = jax.block_until_ready(svm_forward(x2, weight2, bias2, compute_dtype=jnp.float32))
    assert y2_f32.shape == (b2, o2)
    assert jnp.allclose(y2_f32, y2_ref, atol=1e-3, rtol=1e-3)

    y2_bf16 = jax.block_until_ready(svm_forward(x2, weight2, bias2))
    assert y2_bf16.shape == (b2, o2)
    assert jnp.allclose(y2_bf16, y2_ref, atol=5e-2, rtol=5e-2)

    print("KERNEL_OK")
</pallas_src>

<mosaic_0001>
module attributes {stable_mosaic.version = 11 : i64} {
  func.func @kernel(%arg0: i32, %arg1: i32, %arg2: i32, %arg3: memref<8x128xf32, #tpu.memory_space<vmem>>, %arg4: memref<128x128xf32, #tpu.memory_space<vmem>>, %arg5: memref<1x128xf32, #tpu.memory_space<vmem>>, %arg6: memref<8x128xf32, #tpu.memory_space<vmem>>) attributes {dimension_semantics = [#tpu.dimension_semantics<parallel>, #tpu.dimension_semantics<parallel>, #tpu.dimension_semantics<arbitrary>], iteration_bounds = array<i64: 1, 1, 1>, scalar_prefetch = 0 : i64, scratch_operands = 0 : i64, tpu.core_type = #tpu.core_type<tc>, window_params = [{transform_indices = @transform_0, window_bounds = array<i64: 8, 128>}, {transform_indices = @transform_1, window_bounds = array<i64: 128, 128>}, {transform_indices = @transform_2, window_bounds = array<i64: 1, 128>}, {transform_indices = @transform_3, window_bounds = array<i64: 8, 128>}]} {
    %c0_i32 = arith.constant 0 : i32
    %0 = arith.cmpi eq, %arg2, %c0_i32 : i32
    %1 = arith.extui %0 : i1 to i32
    %c0_i32_0 = arith.constant 0 : i32
    %2 = arith.cmpi ne, %1, %c0_i32_0 : i32
    scf.if %2 {
      %cst_14 = arith.constant 0.000000e+00 : f32
      %28 = vector.broadcast %cst_14 : f32 to vector<8x128xf32>
      %c0_15 = arith.constant 0 : index
      %c0_16 = arith.constant 0 : index
      %29 = vector.load %arg6[%c0_15, %c0_16] : memref<8x128xf32, #tpu.memory_space<vmem>>, vector<8x128xf32>
      tpu.vector_store %arg6[%c0_15, %c0_16], %28 {strides = array<i32>} : memref<8x128xf32, #tpu.memory_space<vmem>>, vector<8x128xf32>,
    } else {
    }
    %c0 = arith.constant 0 : index
    %c0_1 = arith.constant 0 : index
    %3 = vector.load %arg3[%c0, %c0_1] : memref<8x128xf32, #tpu.memory_space<vmem>>, vector<8x128xf32>
    %c0_2 = arith.constant 0 : index
    %c0_3 = arith.constant 0 : index
    %4 = vector.load %arg4[%c0_2, %c0_3] : memref<128x128xf32, #tpu.memory_space<vmem>>, vector<128x128xf32>
    %5 = tpu.iota {dimensions = array<i32: 1>} : vector<8x128xi32>
    %c128_i32 = arith.constant 128 : i32
    %6 = arith.muli %arg2, %c128_i32 : i32
    %7 = vector.broadcast %6 : i32 to vector<8x128xi32>
    %8 = arith.addi %5, %7 : vector<8x128xi32>
    %c32_i32 = arith.constant 32 : i32
    %9 = vector.broadcast %c32_i32 : i32 to vector<8x128xi32>
    %10 = arith.cmpi slt, %8, %9 : vector<8x128xi32>
    %cst = arith.constant 0.000000e+00 : f32
    %11 = vector.broadcast %cst : f32 to vector<8x128xf32>
    %12 = arith.select %10, %3, %11 : vector<8x128xi1>, vector<8x128xf32>
    %13 = tpu.iota {dimensions = array<i32: 0>} : vector<128x128xi32>
    %c128_i32_4 = arith.constant 128 : i32
    %14 = arith.muli %arg2, %c128_i32_4 : i32
    %15 = vector.broadcast %14 : i32 to vector<128x128xi32>
    %16 = arith.addi %13, %15 : vector<128x128xi32>
    %c32_i32_5 = arith.constant 32 : i32
    %17 = vector.broadcast %c32_i32_5 : i32 to vector<128x128xi32>
    %18 = arith.cmpi slt, %16, %17 : vector<128x128xi32>
    %cst_6 = arith.constant 0.000000e+00 : f32
    %19 = vector.broadcast %cst_6 : f32 to vector<128x128xf32>
    %20 = arith.select %18, %4, %19 : vector<128x128xi1>, vector<128x128xf32>
    %c0_7 = arith.constant 0 : index
    %c0_8 = arith.constant 0 : index
    %21 = vector.load %arg6[%c0_7, %c0_8] : memref<8x128xf32, #tpu.memory_space<vmem>>, vector<8x128xf32>
    %cst_9 = arith.constant dense<0.000000e+00> : vector<8x128xf32>
    %22 = tpu.matmul %12, %20, %cst_9 {dimension_numbers = #tpu.dot_dimension_numbers<[1], [0], [0], [1], [0, 0, 1, 1], [], []>} : vector<8x128xf32>, vector<128x128xf32>, vector<8x128xf32> -> vector<8x128xf32>
    %23 = arith.addf %21, %22 : vector<8x128xf32>
    %c0_10 = arith.constant 0 : index
    %c0_11 = arith.constant 0 : index
    %24 = vector.load %arg6[%c0_10, %c0_11] : memref<8x128xf32, #tpu.memory_space<vmem>>, vector<8x128xf32>
    tpu.vector_store %arg6[%c0_10, %c0_11], %23 {strides = array<i32>} : memref<8x128xf32, #tpu.memory_space<vmem>>, vector<8x128xf32>,
    %c0_i32_12 = arith.constant 0 : i32
    %25 = arith.cmpi eq, %arg2, %c0_i32_12 : i32
    %26 = arith.extui %25 : i1 to i32
    %c0_i32_13 = arith.constant 0 : i32
    %27 = arith.cmpi ne, %26, %c0_i32_13 : i32
    scf.if %27 {
      %c0_14 = arith.constant 0 : index
      %c0_15 = arith.constant 0 : index
      %28 = vector.load %arg6[%c0_14, %c0_15] : memref<8x128xf32, #tpu.memory_space<vmem>>, vector<8x128xf32>
      %c0_16 = arith.constant 0 : index
      %c0_17 = arith.constant 0 : index
      %29 = vector.load %arg5[%c0_16, %c0_17] : memref<1x128xf32, #tpu.memory_space<vmem>>, vector<1x128xf32>
      %30 = vector.broadcast %29 : vector<1x128xf32> to vector<8x128xf32>
      %31 = arith.addf %28, %30 : vector<8x128xf32>
      %c0_18 = arith.constant 0 : index
      %c0_19 = arith.constant 0 : index
      %32 = vector.load %arg6[%c0_18, %c0_19] : memref<8x128xf32, #tpu.memory_space<vmem>>, vector<8x128xf32>
      tpu.vector_store %arg6[%c0_18, %c0_19], %31 {strides = array<i32>} : memref<8x128xf32, #tpu.memory_space<vmem>>, vector<8x128xf32>,
    } else {
    }
    return
  }
  func.func @transform_0(%arg0: i32, %arg1: i32, %arg2: i32) -> (i32, i32) {
    %c0_i32 = arith.constant 0 : i32
    return %arg0, %arg2 : i32, i32
  }
  func.func @transform_1(%arg0: i32, %arg1: i32, %arg2: i32) -> (i32, i32) {
    %c0_i32 = arith.constant 0 : i32
    return %arg2, %arg1 : i32, i32
  }
  func.func @transform_2(%arg0: i32, %arg1: i32, %arg2: i32) -> (i32, i32) {
    %c0_i32 = arith.constant 0 : i32
    %c0_i32_0 = arith.constant 0 : i32
    return %c0_i32, %arg1 : i32, i32
  }
  func.func @transform_3(%arg0: i32, %arg1: i32, %arg2: i32) -> (i32, i32) {
    %c0_i32 = arith.constant 0 : i32
    return %arg0, %arg1 : i32, i32
  }
}

</mosaic_0001>

<llo_original>
// kernel: tpu_custom_call.1
$region0: #{tpu_custom_call.1}
  #allocation0 [shape = 'u32[]', space=smem, size = 0x4, offset = 0x4, fixed_abs, tag = 'smem constant byte address 0x4 - core index']
  #allocation1 [shape = 'u32[72,128]{1,0:T(1,128)}', space=vmem, size = 0x9000, scoped, tag = 'internal scratch']
  %s0 = inlined_call_operand.vmem [shape: f32[8,32], index: 0, kind: input, shape index: {}]
  %s1 = inlined_call_operand.vmem [shape: f32[32,16], index: 1, kind: input, shape index: {}]
  %s2 = inlined_call_operand.vmem [shape: f32[1,16], index: 2, kind: input, shape index: {}]
  %s3 = inlined_call_operand.hbm [shape: f32[8,16], index: 3, kind: output, shape index: {}]
  %s4 = sld [smem:[#allocation0]]
  $region30: #{tpu_custom_call.1} parent=0
    _
  %s6 = ssub.s32 1, %s4
  %s7 = scalar_select 0, %s6, %s4
  $region1: #{tpu_custom_call.1} parent=0
    #allocation2 [shape = 'u8[4096]{0}', space=vmem, size = 0x1000, scoped, tag = 'output window, operand 0, single buffered']
    #allocation3 [shape = 's32[1]{0}', space=sflag, size = 0x4, scoped, tag = 'scoped memory for tpu_custom_call.1']
    %8 = vsyncpa [#allocation3], 0
    // Predicated region
    $region2: #{tpu_custom_call.1} parent=1 // pred_check
      _
    $region3: #{tpu_custom_call.1} parent=1 // pred_check_branch
      %10 = sbr.rel (0) target = $region5
    $region4: #{tpu_custom_call.1} parent=1 // pred_region
      _
    $region5: #{tpu_custom_call.1} parent=1 // pred_fallthru
      _
    // Predicated region
    $region6: #{tpu_custom_call.1} parent=1 // pred_check
      _
    $region7: #{tpu_custom_call.1} parent=1 // pred_check_branch
      %12 = sbr.rel (0) target = $region9
    $region8: #{tpu_custom_call.1} parent=1 // pred_region
      _
    $region9: #{tpu_custom_call.1} parent=1 // pred_fallthru
      _
    // Predicated region
    $region10: #{tpu_custom_call.1} parent=1 // pred_check
      _
    $region11: #{tpu_custom_call.1} parent=1 // pred_check_branch
      %14 = sbr.rel (0) target = $region13
    $region12: #{tpu_custom_call.1} parent=1 // pred_region
      _
    $region13: #{tpu_custom_call.1} parent=1 // pred_fallthru
      _
    %p15 = scmp.eq.s32.totalorder 0, 0
    // Predicated region
    $region14: #{tpu_custom_call.1} parent=1 // pred_check
      %p16 = pneg %p15
    $region15: #{tpu_custom_call.1} parent=1 // pred_check_branch
      %18 = sbr.rel (%p16) target = $region17
    $region16: #{tpu_custom_call.1} parent=1 // pred_region
      %19 = vst [vmem:[#allocation2] sm:$0xff] 0.0
    $region17: #{tpu_custom_call.1} parent=1 // pred_fallthru
      _
    %v20 = vld [vmem:[%s0] sm:$0xff]
    %v21 = vld [vmem:[%s1] sm:$0xff]
    %v22 = vld [vmem:[%s1 + $0x8] sm:$0xff]
    %v23 = vld [vmem:[%s1 + $0x10] sm:$0xff]
    %v24 = vld [vmem:[%s1 + $0x18] sm:$0xff]
    %v25 = vld [vmem:[%s1 + $0x20] sm:$0xff]
    %v26 = vld [vmem:[%s1 + $0x28] sm:$0xff]
    %v27 = vld [vmem:[%s1 + $0x30] sm:$0xff]
    %v28 = vld [vmem:[%s1 + $0x38] sm:$0xff]
    %v29 = vld [vmem:[%s1 + $0x40] sm:$0xff]
    %v30 = vld [vmem:[%s1 + $0x48] sm:$0xff]
    %v31 = vld [vmem:[%s1 + $0x50] sm:$0xff]
    %v32 = vld [vmem:[%s1 + $0x58] sm:$0xff]
    %v33 = vld [vmem:[%s1 + $0x60] sm:$0xff]
    %v34 = vld [vmem:[%s1 + $0x68] sm:$0xff]
    %v35 = vld [vmem:[%s1 + $0x70] sm:$0xff]
    %v36 = vld [vmem:[%s1 + $0x78] sm:$0xff]
    %v37 = vlaneseq
    %v38 = vand.u32 %v37, 127
    %s39 = smul.u32 0, 128
    %v40 = vstv %s39
    %v41 = vadd.s32 %v38, %v40
    %vm42 = vcmp.lt.s32.totalorder %v41, 32
    %v43 = vsel %vm42, %v20, 0.0
    %v44 = vlaneseq
    %v45 = vshrl.u32 %v44, 7
    %v46 = vadd.s32 %v45, 8
    %v47 = vadd.s32 %v45, 16
    %v48 = vadd.s32 %v45, 24
    %v49 = vadd.s32 %v45, 32
    %v50 = vadd.s32 %v45, 40
    %v51 = vadd.s32 %v45, 48
    %v52 = vadd.s32 %v45, 56
    %v53 = vadd.s32 %v45, 64
    %v54 = vadd.s32 %v45, 72
    %v55 = vadd.s32 %v45, 80
    %v56 = vadd.s32 %v45, 88
    %v57 = vadd.s32 %v45, 96
    %v58 = vadd.s32 %v45, 104
    %v59 = vadd.s32 %v45, 112
    %v60 = vadd.s32 %v45, 120
    %v61 = vadd.s32 %v45, %v40
    %v62 = vadd.s32 %v46, %v40
    %v63 = vadd.s32 %v47, %v40
    %v64 = vadd.s32 %v48, %v40
    %v65 = vadd.s32 %v49, %v40
    %v66 = vadd.s32 %v50, %v40
    %v67 = vadd.s32 %v51, %v40
    %v68 = vadd.s32 %v52, %v40
    %v69 = vadd.s32 %v53, %v40
    %v70 = vadd.s32 %v54, %v40
    %v71 = vadd.s32 %v55, %v40
    %v72 = vadd.s32 %v56, %v40
    %v73 = vadd.s32 %v57, %v40
    %v74 = vadd.s32 %v58, %v40
    %v75 = vadd.s32 %v59, %v40
    %v76 = vadd.s32 %v60, %v40
    %vm77 = vcmp.lt.s32.totalorder %v61, 32
    %vm78 = vcmp.lt.s32.totalorder %v62, 32
    %vm79 = vcmp.lt.s32.totalorder %v63, 32
    %vm80 = vcmp.lt.s32.totalorder %v64, 32
    %vm81 = vcmp.lt.s32.totalorder %v65, 32
    %vm82 = vcmp.lt.s32.totalorder %v66, 32
    %vm83 = vcmp.lt.s32.totalorder %v67, 32
    %vm84 = vcmp.lt.s32.totalorder %v68, 32
    %vm85 = vcmp.lt.s32.totalorder %v69, 32
    %vm86 = vcmp.lt.s32.totalorder %v70, 32
    %vm87 = vcmp.lt.s32.totalorder %v71, 32
    %vm88 = vcmp.lt.s32.totalorder %v72, 32
    %vm89 = vcmp.lt.s32.totalorder %v73, 32
    %vm90 = vcmp.lt.s32.totalorder %v74, 32
    %vm91 = vcmp.lt.s32.totalorder %v75, 32
    %vm92 = vcmp.lt.s32.totalorder %v76, 32
    %v93 = vsel %vm77, %v21, 0.0
    %v94 = vsel %vm78, %v22, 0.0
    %v95 = vsel %vm79, %v23, 0.0
    %v96 = vsel %vm80, %v24, 0.0
    %v97 = vsel %vm81, %v25, 0.0
    %v98 = vsel %vm82, %v26, 0.0
    %v99 = vsel %vm83, %v27, 0.0
    %v100 = vsel %vm84, %v28, 0.0
    %v101 = vsel %vm85, %v29, 0.0
    %v102 = vsel %vm86, %v30, 0.0
    %v103 = vsel %vm87, %v31, 0.0
    %v104 = vsel %vm88, %v32, 0.0
    %v105 = vsel %vm89, %v33, 0.0
    %v106 = vsel %vm90, %v34, 0.0
    %v107 = vsel %vm91, %v35, 0.0
    %v108 = vsel %vm92, %v36, 0.0
    %v109 = vld [vmem:[#allocation2] sm:$0xff]
    %110 = vmatpush.msra.mxu0 %v108
    %111 = vmatpush.msra.mxu0 %v107
    %112 = vmatpush.msra.mxu0 %v106
    %113 = vmatpush.msra.mxu0 %v105
    %114 = vmatpush.msra.mxu0 %v104
    %115 = vmatpush.msra.mxu0 %v103
    %116 = vmatpush.msra.mxu0 %v102
    %117 = vmatpush.msra.mxu0 %v101
    %118 = vmatpush.msra.mxu0 %v100
    %119 = vmatpush.msra.mxu0 %v99
    %120 = vmatpush.msra.mxu0 %v98
    %121 = vmatpush.msra.mxu0 %v97
    %122 = vmatpush.msra.mxu0 %v96
    %123 = vmatpush.msra.mxu0 %v95
    %124 = vmatpush.msra.mxu0 %v94
    %125 = vmatpush.msra.mxu0 %v93
    %126 = vmatmul.f32.gmra.mxu0 %v43
    %v127 = vpop.f32.mrf.mxu0
    %v128 = vadd.f32 0.0, %v127
    %129 = vdwg.mxu0
    %v130 = vadd.f32 %v109, %v128
    %131 = vst [vmem:[#allocation2] sm:$0xff] %v130
    // Predicated region
    $region18: #{tpu_custom_call.1} parent=1 // pred_check
      %p132 = pneg %p15
    $region19: #{tpu_custom_call.1} parent=1 // pred_check_branch
      %134 = sbr.rel (%p132) target = $region21
    $region20: #{tpu_custom_call.1} parent=1 // pred_region
      %v135 = vld [vmem:[#allocation2] sm:$0xff]
      %v136 = vld [vmem:[%s2] sm:$0x1]
      %v138 = vperm.slane %v136, 0
      %v140 = vadd.f32 %v135, %v138
      %141 = vst [vmem:[#allocation2] sm:$0xff] %v140
    $region21: #{tpu_custom_call.1} parent=1 // pred_fallthru
      _
    // Predicated region
    $region22: #{tpu_custom_call.1} parent=1 // pred_check
      _
    $region23: #{tpu_custom_call.1} parent=1 // pred_check_branch
      %143 = sbr.rel (0) target = $region25
    $region24: #{tpu_custom_call.1} parent=1 // pred_region
      %145 = vsyncadd [#allocation3], 0
      %s147 = sshll.u32 [#allocation2], 4
      %s148 = int_to_ptr.vmem [resolvable:$true] %s147
      %s149 = sshll.u32 %s3, 4
      %s150 = int_to_ptr.hbm [resolvable:$true] %s149
      %152 = dma.vmem_to_hbm [thread:$0]  %s148, 128, %s150, [#allocation3]
    $region25: #{tpu_custom_call.1} parent=1 // pred_fallthru
      _
    // Predicated region
    $region26: #{tpu_custom_call.1} parent=1 // pred_check
      _
    $region27: #{tpu_custom_call.1} parent=1 // pred_check_branch
      %154 = sbr.rel (0) target = $region29
    $region28: #{tpu_custom_call.1} parent=1 // pred_region
      %156 = dma.done [#allocation3], 128
    $region29: #{tpu_custom_call.1} parent=1 // pred_fallthru
      _
    %157 = vsyncpa [#allocation3], 1

</llo_original>
